<compile_context>
chip_gen: v5e
topology: v5e:2x2
jax: 0.10.0
libtpu: 0.0.40
codegen_flags: <defaults>
</compile_context>

<pallas_src>
import numpy as np
import jax
import jax.numpy as jnp
from jax import lax
from jax.experimental import pallas as pl
from jax.experimental.pallas import tpu as pltpu

# ----------------------------- model config ---------------------------------
NUM_USER = 24
NUM_ITEM = 40
NUM_KEYWORD = 16
EMBED_DIM = 32
NUM_LAYER = 2
NUM_NEG_SAMPLE = 2
LOSS_WEIGHT = 0.1
BATCH = 8
MAX_QUERY_LEN = 4
N_NODES = NUM_USER + NUM_ITEM + NUM_KEYWORD        # 80
TOTAL_ROWS = (2 + NUM_NEG_SAMPLE) * BATCH          # users | pos items | negs


# ----------------------------- fused Pallas kernel ---------------------------
def _hypersar_fused_kernel(nid_ref, qls_ref, adj_ref, x0_ref, kwcnt_ref,
                           kw0t_ref, loss_ref, agg_ref, gat_ref):
    x0 = x0_ref[...]                                    # [N, D] f32

    # ---- hypergraph propagation + layer mean (bf16 MXU, f32 accumulation) ---
    adj_bf = adj_ref[...].astype(jnp.bfloat16)          # resident in VMEM
    x = x0
    acc = x0
    for _ in range(NUM_LAYER):                          # static unroll
        x = jnp.dot(adj_bf, x.astype(jnp.bfloat16),
                    preferred_element_type=jnp.float32)
        acc = acc + x
    agg_ref[...] = acc * (1.0 / (NUM_LAYER + 1))        # [N, D] layer mean

    # ---- scalar-indexed row gather (SMEM ids -> dynamic sublane slices) -----
    for r in range(TOTAL_ROWS):                         # static unroll, B small
        gat_ref[pl.ds(r, 1), :] = agg_ref[pl.ds(nid_ref[r], 1), :]
    gathered = gat_ref[...]                             # [(2+NN)*B, D]

    u = gathered[0 * BATCH:1 * BATCH]                   # [B, D]
    it = gathered[1 * BATCH:2 * BATCH]                  # [B, D]
    negs = gathered[2 * BATCH:]                         # [NN*B, D]

    # layer-0 keyword table (the PyTorch code replaces propagated keyword
    # embeddings by the raw embedding weights)
    kw0 = x0[NUM_USER + NUM_ITEM:]                      # [K, D]

    # ---- query embedding: SumAggregator == keyword-count matmul -------------
    kw_counts = kwcnt_ref[...]                          # [B, K]
    q = jnp.dot(kw_counts, kw0, preferred_element_type=jnp.float32)   # [B, D]

    # ---- CIM (BPR) loss: all negatives in one stacked reduction -------------
    uq = u + q
    pos_s = jnp.sum(uq * it, axis=-1, keepdims=True)                  # [B, 1]
    uq_rep = jnp.concatenate([uq] * NUM_NEG_SAMPLE, axis=0)           # [NN*B, D]
    pos_rep = jnp.concatenate([pos_s] * NUM_NEG_SAMPLE, axis=0)       # [NN*B, 1]
    neg_s = jnp.sum(uq_rep * negs, axis=-1, keepdims=True)
    d = neg_s - pos_rep
    # mean(softplus(neg - pos)) over (neg_sample, batch), stable f32 form
    sp = jnp.maximum(d, 0.0) + jnp.log(1.0 + jnp.exp(-jnp.abs(d)))
    cim = jnp.mean(sp)

    # ---- QL loss (static-shape masked via keyword counts) -------------------
    ui = gathered[0:2 * BATCH]                          # [2B, D]
    logits = jnp.dot(ui, kw0t_ref[...],
                     preferred_element_type=jnp.float32)              # [2B, K]
    m = jnp.max(logits, axis=-1, keepdims=True)
    e = jnp.exp(logits - m)
    sm = e * pl.reciprocal(jnp.sum(e, axis=-1, keepdims=True), approx=True)
    log_prob = -jnp.log(sm[:BATCH] * sm[BATCH:] + 1e-7)               # [B, K]

    # gather-at-keyword-ids + pad mask == weighting by keyword counts.
    # Non-search rows have zero counts, so they contribute nothing.
    row_total = jnp.sum(kw_counts * log_prob)           # scalar

    bs = qls_ref[0]                                     # number of search rows
    sum_inv_qs = qls_ref[1]                             # sum of 1/query_size
    # torch semantics: ([Bs]/[Bs,1]).mean() == sum(row_sums)*sum(1/qs)/Bs^2
    ql = row_total * sum_inv_qs / jnp.maximum(bs * bs, 1.0)

    loss_ref[0, 0] = cim + LOSS_WEIGHT * ql


def hypersar_fused_loss(node_ids, ql_scalars, norm_adj, x0, kw_counts, kw0t):
    bytes_accessed = (norm_adj.size + x0.size + kw_counts.size + kw0t.size) * 4 \
        + node_ids.size * 4 + ql_scalars.size * 4 + 4
    out = pl.pallas_call(
        _hypersar_fused_kernel,
        out_shape=jax.ShapeDtypeStruct((1, 1), jnp.float32),
        in_specs=[
            pl.BlockSpec(memory_space=pltpu.MemorySpace.SMEM),   # node ids
            pl.BlockSpec(memory_space=pltpu.MemorySpace.SMEM),   # (bs, sum 1/qs)
            pl.BlockSpec(memory_space=pltpu.MemorySpace.VMEM),   # adjacency
            pl.BlockSpec(memory_space=pltpu.MemorySpace.VMEM),   # x0 embeddings
            pl.BlockSpec(memory_space=pltpu.MemorySpace.VMEM),   # keyword counts
            pl.BlockSpec(memory_space=pltpu.MemorySpace.VMEM),   # kw_emb^T [D,K]
        ],
        out_specs=pl.BlockSpec(memory_space=pltpu.MemorySpace.SMEM),
        scratch_shapes=[
            pltpu.VMEM((N_NODES, EMBED_DIM), jnp.float32),       # agg embeddings
            pltpu.VMEM((TOTAL_ROWS, EMBED_DIM), jnp.float32),    # gathered rows
        ],
        cost_estimate=pl.CostEstimate(
            flops=2 * N_NODES * N_NODES * EMBED_DIM * NUM_LAYER
            + 2 * BATCH * NUM_KEYWORD * EMBED_DIM
            + 2 * 2 * BATCH * EMBED_DIM * NUM_KEYWORD,
            transcendentals=4 * BATCH * NUM_KEYWORD + 2 * NUM_NEG_SAMPLE * BATCH,
            bytes_accessed=bytes_accessed,
        ),
    )(node_ids, ql_scalars, norm_adj, x0, kw_counts, kw0t)
    return out[0, 0]


# ----------------------------- jitted forward --------------------------------
@jax.jit
def hypersar_forward(params, norm_adj, user_ids, item_ids, keyword_ids,
                     query_sizes, neg_item_ids):
    user_emb, item_emb, kw_emb = params
    x0 = jnp.concatenate([user_emb, item_emb, kw_emb], axis=0)          # [N, D]

    # absolute node-row indices (users | pos items | neg items flattened)
    node_ids = jnp.concatenate([
        user_ids,
        item_ids + NUM_USER,
        neg_item_ids.reshape(-1) + NUM_USER,
    ]).astype(jnp.int32)                                                 # [(2+NN)B]

    # keyword-count matrix: ids -1 (padding) and NUM_KEYWORD ("no query")
    # fall outside [0, K) and contribute zero rows in one_hot.
    kw_counts = jnp.sum(jax.nn.one_hot(keyword_ids, NUM_KEYWORD,
                                       dtype=jnp.float32), axis=1)       # [B, K]

    # QL scalars (static shapes, no host sync): #search rows and sum of 1/qs,
    # guarded against query_size == 0 on non-search rows.
    sel = (keyword_ids[:, 0] != NUM_KEYWORD).astype(jnp.float32)
    bs = jnp.sum(sel)
    sum_inv_qs = jnp.sum(sel / jnp.maximum(query_sizes.astype(jnp.float32), 1.0))
    ql_scalars = jnp.stack([bs, sum_inv_qs]).astype(jnp.float32)         # (2,)

    kw0t = kw_emb.T                                                      # [D, K]

    # TODO(synk): SparseDropout (stochastic edge dropout on the sparse adjacency)
    # is training-time randomness; treated as identity here.
    return hypersar_fused_loss(node_ids, ql_scalars, norm_adj, x0,
                               kw_counts, kw0t)


# ----------------------------- pure-JAX reference ----------------------------
def reference_forward(params, norm_adj, user_ids, item_ids, keyword_ids,
                      query_sizes, neg_item_ids):
    """Eager reference mirroring the PyTorch forward literally (incl. the
    [Bs]/[Bs,1] broadcast and dynamic boolean selection)."""
    hp = lax.Precision.HIGHEST
    user_emb, item_emb, kw_emb = params
    x = jnp.concatenate([user_emb, item_emb, kw_emb], axis=0)
    layers = [x]
    for _ in range(NUM_LAYER):
        x = jnp.dot(norm_adj, x, precision=hp)
        layers.append(x)
    agg = jnp.mean(jnp.stack(layers, axis=1), axis=1)
    all_user = agg[:NUM_USER]
    all_item = agg[NUM_USER:NUM_USER + NUM_ITEM]
    ext_kw = jnp.zeros((NUM_KEYWORD + 2, EMBED_DIM), jnp.float32)
    ext_kw = ext_kw.at[:NUM_KEYWORD].set(kw_emb)

    u = all_user[user_ids]
    it = all_item[item_ids]
    safe_ids = jnp.where(keyword_ids < 0, NUM_KEYWORD + 1, keyword_ids)
    q = jnp.sum(ext_kw[safe_ids], axis=1)

    uq = u + q
    pos_s = jnp.sum(uq * it, axis=-1)
    cim = 0.0
    for n in range(NUM_NEG_SAMPLE):
        neg = all_item[neg_item_ids[n]]
        neg_s = jnp.sum(uq * neg, axis=-1)
        cim += jnp.mean(jax.nn.softplus(neg_s - pos_s))
    cim /= NUM_NEG_SAMPLE

    ql = 0.0
    if LOSS_WEIGHT > 0:
        selector = np.asarray(keyword_ids[:, 0] != NUM_KEYWORD)
        idx = np.nonzero(selector)[0]
        if idx.size > 0:
            u_s, it_s = u[idx], it[idx]
            qs_s = query_sizes[idx].astype(jnp.float32)
            kwid_s = keyword_ids[idx]
            ul = jnp.dot(u_s, kw_emb.T, precision=hp)
            il = jnp.dot(it_s, kw_emb.T, precision=hp)
            lp = -jnp.log(jax.nn.softmax(ul, -1) * jax.nn.softmax(il, -1) + 1e-7)
            mask = kwid_s == -1
            gids = jnp.where(mask, 0, kwid_s)
            g = jnp.take_along_axis(lp, gids, axis=1)
            g = jnp.where(mask, 0.0, g)
            ql = jnp.mean(jnp.sum(g, axis=1) / qs_s[:, None])  # [Bs]/[Bs,1] broadcast
    return cim + LOSS_WEIGHT * ql


# ----------------------------- param / data setup ----------------------------
def init_params(key):
    ku, ki, kk = jax.random.split(key, 3)
    scale = 1.0 / EMBED_DIM
    return (scale * jax.random.normal(ku, (NUM_USER, EMBED_DIM), jnp.float32),
            scale * jax.random.normal(ki, (NUM_ITEM, EMBED_DIM), jnp.float32),
            scale * jax.random.normal(kk, (NUM_KEYWORD, EMBED_DIM), jnp.float32))


def make_norm_adj(key):
    # deterministic synthetic symmetric-normalized hypergraph adjacency
    a = (jax.random.uniform(key, (N_NODES, N_NODES)) < 0.15).astype(jnp.float32)
    a = jnp.maximum(a, a.T)
    a = a * (1.0 - jnp.eye(N_NODES, dtype=jnp.float32))
    deg = jnp.clip(jnp.sum(a, axis=1), 1.0, None)
    dinv = 1.0 / jnp.sqrt(deg)
    return a * dinv[:, None] * dinv[None, :]


# --------------------------------- main --------------------------------------
if __name__ == "__main__":
    root = jax.random.PRNGKey(0)
    k_param, k_adj, k_user, k_item, k_neg = jax.random.split(root, 5)

    params = init_params(k_param)
    norm_adj = make_norm_adj(k_adj)

    user_ids = jax.random.randint(k_user, (BATCH,), 0, NUM_USER, dtype=jnp.int32)
    item_ids = jax.random.randint(k_item, (BATCH,), 0, NUM_ITEM, dtype=jnp.int32)

    # keyword_ids / query_sizes: even rows = search, odd rows = recommendation
    rng = np.random.default_rng(0)
    kw_ids = np.full((BATCH, MAX_QUERY_LEN), -1, dtype=np.int32)
    q_sizes = np.ones((BATCH,), dtype=np.int32)
    for b in range(BATCH):
        if b % 2 == 0:  # search interaction
            sz = 1 + (b // 2) % MAX_QUERY_LEN
            kw_ids[b, :sz] = rng.integers(0, NUM_KEYWORD, size=sz)
            q_sizes[b] = sz
        else:           # recommendation interaction ("no query" id)
            kw_ids[b, 0] = NUM_KEYWORD
    keyword_ids = jnp.asarray(kw_ids)
    query_sizes = jnp.asarray(q_sizes)

    # deterministic replacement for sample_items()
    neg_item_ids = jax.random.randint(k_neg, (NUM_NEG_SAMPLE, BATCH), 0, NUM_ITEM,
                                      dtype=jnp.int32)

    loss = hypersar_forward(params, norm_adj, user_ids, item_ids,
                            keyword_ids, query_sizes, neg_item_ids)
    loss = jax.block_until_ready(loss)

    ref = reference_forward(params, norm_adj, user_ids, item_ids,
                            keyword_ids, query_sizes, neg_item_ids)

    assert np.isfinite(float(loss))
    np.testing.assert_allclose(float(loss), float(ref), rtol=5e-3, atol=5e-4)
    # TODO(synk): loss.backward() + Adam optimizer step are training-side ops
    # with no forward-pass Pallas equivalent; only the loss value is computed.
    print("KERNEL_OK")
</pallas_src>

<mosaic_0001>
module attributes {stable_mosaic.version = 11 : i64} {
  func.func @_hypersar_fused_kernel(%arg0: memref<32xi32, #tpu.memory_space<smem>>, %arg1: memref<2xf32, #tpu.memory_space<smem>>, %arg2: memref<80x80xf32, #tpu.memory_space<vmem>>, %arg3: memref<80x32xf32, #tpu.memory_space<vmem>>, %arg4: memref<8x16xf32, #tpu.memory_space<vmem>>, %arg5: memref<32x16xf32, #tpu.memory_space<vmem>>, %arg6: memref<1x1xf32, #tpu.memory_space<smem>>, %arg7: memref<80x32xf32, #tpu.memory_space<vmem>>, %arg8: memref<32x32xf32, #tpu.memory_space<vmem>>) attributes {dimension_semantics = [], scalar_prefetch = 0 : i64, scratch_operands = 2 : i64, tpu.core_type = #tpu.core_type<tc>} {
    %c0 = arith.constant 0 : index
    %c0_0 = arith.constant 0 : index
    %0 = vector.load %arg3[%c0, %c0_0] : memref<80x32xf32, #tpu.memory_space<vmem>>, vector<80x32xf32>
    %c0_1 = arith.constant 0 : index
    %c0_2 = arith.constant 0 : index
    %1 = vector.load %arg2[%c0_1, %c0_2] : memref<80x80xf32, #tpu.memory_space<vmem>>, vector<80x80xf32>
    %2 = arith.truncf %1 : vector<80x80xf32> to vector<80x80xbf16>
    %3 = arith.truncf %0 : vector<80x32xf32> to vector<80x32xbf16>
    %cst = arith.constant dense<0.000000e+00> : vector<80x32xf32>
    %4 = tpu.matmul %2, %3, %cst {dimension_numbers = #tpu.dot_dimension_numbers<[1], [0], [0], [1], [0, 0, 1, 1], [], []>} : vector<80x80xbf16>, vector<80x32xbf16>, vector<80x32xf32> -> vector<80x32xf32>
    %5 = arith.addf %0, %4 : vector<80x32xf32>
    %6 = arith.truncf %4 : vector<80x32xf32> to vector<80x32xbf16>
    %cst_3 = arith.constant dense<0.000000e+00> : vector<80x32xf32>
    %7 = tpu.matmul %2, %6, %cst_3 {dimension_numbers = #tpu.dot_dimension_numbers<[1], [0], [0], [1], [0, 0, 1, 1], [], []>} : vector<80x80xbf16>, vector<80x32xbf16>, vector<80x32xf32> -> vector<80x32xf32>
    %8 = arith.addf %5, %7 : vector<80x32xf32>
    %cst_4 = arith.constant 0.333333343 : f32
    %9 = vector.broadcast %cst_4 : f32 to vector<80x32xf32>
    %10 = arith.mulf %8, %9 : vector<80x32xf32>
    %c0_5 = arith.constant 0 : index
    %c0_6 = arith.constant 0 : index
    %11 = vector.load %arg7[%c0_5, %c0_6] : memref<80x32xf32, #tpu.memory_space<vmem>>, vector<80x32xf32>
    tpu.vector_store %arg7[%c0_5, %c0_6], %10 {strides = array<i32>} : memref<80x32xf32, #tpu.memory_space<vmem>>, vector<80x32xf32>,
    %c0_7 = arith.constant 0 : index
    %12 = memref.load %arg0[%c0_7] : memref<32xi32, #tpu.memory_space<smem>>
    %13 = arith.index_cast %12 : i32 to index
    %c0_8 = arith.constant 0 : index
    %14 = vector.load %arg7[%13, %c0_8] : memref<80x32xf32, #tpu.memory_space<vmem>>, vector<1x32xf32>
    %c0_9 = arith.constant 0 : index
    %c0_10 = arith.constant 0 : index
    %15 = vector.load %arg8[%c0_9, %c0_10] : memref<32x32xf32, #tpu.memory_space<vmem>>, vector<1x32xf32>
    tpu.vector_store %arg8[%c0_9, %c0_10], %14 {strides = array<i32>} : memref<32x32xf32, #tpu.memory_space<vmem>>, vector<1x32xf32>,
    %c1 = arith.constant 1 : index
    %16 = memref.load %arg0[%c1] : memref<32xi32, #tpu.memory_space<smem>>
    %17 = arith.index_cast %16 : i32 to index
    %c0_11 = arith.constant 0 : index
    %18 = vector.load %arg7[%17, %c0_11] : memref<80x32xf32, #tpu.memory_space<vmem>>, vector<1x32xf32>
    %c1_12 = arith.constant 1 : index
    %c0_13 = arith.constant 0 : index
    %19 = vector.load %arg8[%c1_12, %c0_13] : memref<32x32xf32, #tpu.memory_space<vmem>>, vector<1x32xf32>
    tpu.vector_store %arg8[%c1_12, %c0_13], %18 {strides = array<i32>} : memref<32x32xf32, #tpu.memory_space<vmem>>, vector<1x32xf32>,
    %c2 = arith.constant 2 : index
    %20 = memref.load %arg0[%c2] : memref<32xi32, #tpu.memory_space<smem>>
    %21 = arith.index_cast %20 : i32 to index
    %c0_14 = arith.constant 0 : index
    %22 = vector.load %arg7[%21, %c0_14] : memref<80x32xf32, #tpu.memory_space<vmem>>, vector<1x32xf32>
    %c2_15 = arith.constant 2 : index
    %c0_16 = arith.constant 0 : index
    %23 = vector.load %arg8[%c2_15, %c0_16] : memref<32x32xf32, #tpu.memory_space<vmem>>, vector<1x32xf32>
    tpu.vector_store %arg8[%c2_15, %c0_16], %22 {strides = array<i32>} : memref<32x32xf32, #tpu.memory_space<vmem>>, vector<1x32xf32>,
    %c3 = arith.constant 3 : index
    %24 = memref.load %arg0[%c3] : memref<32xi32, #tpu.memory_space<smem>>
    %25 = arith.index_cast %24 : i32 to index
    %c0_17 = arith.constant 0 : index
    %26 = vector.load %arg7[%25, %c0_17] : memref<80x32xf32, #tpu.memory_space<vmem>>, vector<1x32xf32>
    %c3_18 = arith.constant 3 : index
    %c0_19 = arith.constant 0 : index
    %27 = vector.load %arg8[%c3_18, %c0_19] : memref<32x32xf32, #tpu.memory_space<vmem>>, vector<1x32xf32>
    tpu.vector_store %arg8[%c3_18, %c0_19], %26 {strides = array<i32>} : memref<32x32xf32, #tpu.memory_space<vmem>>, vector<1x32xf32>,
    %c4 = arith.constant 4 : index
    %28 = memref.load %arg0[%c4] : memref<32xi32, #tpu.memory_space<smem>>
    %29 = arith.index_cast %28 : i32 to index
    %c0_20 = arith.constant 0 : index
    %30 = vector.load %arg7[%29, %c0_20] : memref<80x32xf32, #tpu.memory_space<vmem>>, vector<1x32xf32>
    %c4_21 = arith.constant 4 : index
    %c0_22 = arith.constant 0 : index
    %31 = vector.load %arg8[%c4_21, %c0_22] : memref<32x32xf32, #tpu.memory_space<vmem>>, vector<1x32xf32>
    tpu.vector_store %arg8[%c4_21, %c0_22], %30 {strides = array<i32>} : memref<32x32xf32, #tpu.memory_space<vmem>>, vector<1x32xf32>,
    %c5 = arith.constant 5 : index
    %32 = memref.load %arg0[%c5] : memref<32xi32, #tpu.memory_space<smem>>
    %33 = arith.index_cast %32 : i32 to index
    %c0_23 = arith.constant 0 : index
    %34 = vector.load %arg7[%33, %c0_23] : memref<80x32xf32, #tpu.memory_space<vmem>>, vector<1x32xf32>
    %c5_24 = arith.constant 5 : index
    %c0_25 = arith.constant 0 : index
    %35 = vector.load %arg8[%c5_24, %c0_25] : memref<32x32xf32, #tpu.memory_space<vmem>>, vector<1x32xf32>
    tpu.vector_store %arg8[%c5_24, %c0_25], %34 {strides = array<i32>} : memref<32x32xf32, #tpu.memory_space<vmem>>, vector<1x32xf32>,
    %c6 = arith.constant 6 : index
    %36 = memref.load %arg0[%c6] : memref<32xi32, #tpu.memory_space<smem>>
    %37 = arith.index_cast %36 : i32 to index
    %c0_26 = arith.constant 0 : index
    %38 = vector.load %arg7[%37, %c0_26] : memref<80x32xf32, #tpu.memory_space<vmem>>, vector<1x32xf32>
    %c6_27 = arith.constant 6 : index
    %c0_28 = arith.constant 0 : index
    %39 = vector.load %arg8[%c6_27, %c0_28] : memref<32x32xf32, #tpu.memory_space<vmem>>, vector<1x32xf32>
    tpu.vector_store %arg8[%c6_27, %c0_28], %38 {strides = array<i32>} : memref<32x32xf32, #tpu.memory_space<vmem>>, vector<1x32xf32>,
    %c7 = arith.constant 7 : index
    %40 = memref.load %arg0[%c7] : memref<32xi32, #tpu.memory_space<smem>>
    %41 = arith.index_cast %40 : i32 to index
    %c0_29 = arith.constant 0 : index
    %42 = vector.load %arg7[%41, %c0_29] : memref<80x32xf32, #tpu.memory_space<vmem>>, vector<1x32xf32>
    %c7_30 = arith.constant 7 : index
    %c0_31 = arith.constant 0 : index
    %43 = vector.load %arg8[%c7_30, %c0_31] : memref<32x32xf32, #tpu.memory_space<vmem>>, vector<1x32xf32>
    tpu.vector_store %arg8[%c7_30, %c0_31], %42 {strides = array<i32>} : memref<32x32xf32, #tpu.memory_space<vmem>>, vector<1x32xf32>,
    %c8 = arith.constant 8 : index
    %44 = memref.load %arg0[%c8] : memref<32xi32, #tpu.memory_space<smem>>
    %45 = arith.index_cast %44 : i32 to index
    %c0_32 = arith.constant 0 : index
    %46 = vector.load %arg7[%45, %c0_32] : memref<80x32xf32, #tpu.memory_space<vmem>>, vector<1x32xf32>
    %c8_33 = arith.constant 8 : index
    %c0_34 = arith.constant 0 : index
    %47 = vector.load %arg8[%c8_33, %c0_34] : memref<32x32xf32, #tpu.memory_space<vmem>>, vector<1x32xf32>
    tpu.vector_store %arg8[%c8_33, %c0_34], %46 {strides = array<i32>} : memref<32x32xf32, #tpu.memory_space<vmem>>, vector<1x32xf32>,
    %c9 = arith.constant 9 : index
    %48 = memref.load %arg0[%c9] : memref<32xi32, #tpu.memory_space<smem>>
    %49 = arith.index_cast %48 : i32 to index
    %c0_35 = arith.constant 0 : index
    %50 = vector.load %arg7[%49, %c0_35] : memref<80x32xf32, #tpu.memory_space<vmem>>, vector<1x32xf32>
    %c9_36 = arith.constant 9 : index
    %c0_37 = arith.constant 0 : index
    %51 = vector.load %arg8[%c9_36, %c0_37] : memref<32x32xf32, #tpu.memory_space<vmem>>, vector<1x32xf32>
    tpu.vector_store %arg8[%c9_36, %c0_37], %50 {strides = array<i32>} : memref<32x32xf32, #tpu.memory_space<vmem>>, vector<1x32xf32>,
    %c10 = arith.constant 10 : index
    %52 = memref.load %arg0[%c10] : memref<32xi32, #tpu.memory_space<smem>>
    %53 = arith.index_cast %52 : i32 to index
    %c0_38 = arith.constant 0 : index
    %54 = vector.load %arg7[%53, %c0_38] : memref<80x32xf32, #tpu.memory_space<vmem>>, vector<1x32xf32>
    %c10_39 = arith.constant 10 : index
    %c0_40 = arith.constant 0 : index
    %55 = vector.load %arg8[%c10_39, %c0_40] : memref<32x32xf32, #tpu.memory_space<vmem>>, vector<1x32xf32>
    tpu.vector_store %arg8[%c10_39, %c0_40], %54 {strides = array<i32>} : memref<32x32xf32, #tpu.memory_space<vmem>>, vector<1x32xf32>,
    %c11 = arith.constant 11 : index
    %56 = memref.load %arg0[%c11] : memref<32xi32, #tpu.memory_space<smem>>
    %57 = arith.index_cast %56 : i32 to index
    %c0_41 = arith.constant 0 : index
    %58 = vector.load %arg7[%57, %c0_41] : memref<80x32xf32, #tpu.memory_space<vmem>>, vector<1x32xf32>
    %c11_42 = arith.constant 11 : index
    %c0_43 = arith.constant 0 : index
    %59 = vector.load %arg8[%c11_42, %c0_43] : memref<32x32xf32, #tpu.memory_space<vmem>>, vector<1x32xf32>
    tpu.vector_store %arg8[%c11_42, %c0_43], %58 {strides = array<i32>} : memref<32x32xf32, #tpu.memory_space<vmem>>, vector<1x32xf32>,
    %c12 = arith.constant 12 : index
    %60 = memref.load %arg0[%c12] : memref<32xi32, #tpu.memory_space<smem>>
    %61 = arith.index_cast %60 : i32 to index
    %c0_44 = arith.constant 0 : index
    %62 = vector.load %arg7[%61, %c0_44] : memref<80x32xf32, #tpu.memory_space<vmem>>, vector<1x32xf32>
    %c12_45 = arith.constant 12 : index
    %c0_46 = arith.constant 0 : index
    %63 = vector.load %arg8[%c12_45, %c0_46] : memref<32x32xf32, #tpu.memory_space<vmem>>, vector<1x32xf32>
    tpu.vector_store %arg8[%c12_45, %c0_46], %62 {strides = array<i32>} : memref<32x32xf32, #tpu.memory_space<vmem>>, vector<1x32xf32>,
    %c13 = arith.constant 13 : index
    %64 = memref.load %arg0[%c13] : memref<32xi32, #tpu.memory_space<smem>>
    %65 = arith.index_cast %64 : i32 to index
    %c0_47 = arith.constant 0 : index
    %66 = vector.load %arg7[%65, %c0_47] : memref<80x32xf32, #tpu.memory_space<vmem>>, vector<1x32xf32>
    %c13_48 = arith.constant 13 : index
    %c0_49 = arith.constant 0 : index
    %67 = vector.load %arg8[%c13_48, %c0_49] : memref<32x32xf32, #tpu.memory_space<vmem>>, vector<1x32xf32>
    tpu.vector_store %arg8[%c13_48, %c0_49], %66 {strides = array<i32>} : memref<32x32xf32, #tpu.memory_space<vmem>>, vector<1x32xf32>,
    %c14 = arith.constant 14 : index
    %68 = memref.load %arg0[%c14] : memref<32xi32, #tpu.memory_space<smem>>
    %69 = arith.index_cast %68 : i32 to index
    %c0_50 = arith.constant 0 : index
    %70 = vector.load %arg7[%69, %c0_50] : memref<80x32xf32, #tpu.memory_space<vmem>>, vector<1x32xf32>
    %c14_51 = arith.constant 14 : index
    %c0_52 = arith.constant 0 : index
    %71 = vector.load %arg8[%c14_51, %c0_52] : memref<32x32xf32, #tpu.memory_space<vmem>>, vector<1x32xf32>
    tpu.vector_store %arg8[%c14_51, %c0_52], %70 {strides = array<i32>} : memref<32x32xf32, #tpu.memory_space<vmem>>, vector<1x32xf32>,
    %c15 = arith.constant 15 : index
    %72 = memref.load %arg0[%c15] : memref<32xi32, #tpu.memory_space<smem>>
    %73 = arith.index_cast %72 : i32 to index
    %c0_53 = arith.constant 0 : index
    %74 = vector.load %arg7[%73, %c0_53] : memref<80x32xf32, #tpu.memory_space<vmem>>, vector<1x32xf32>
    %c15_54 = arith.constant 15 : index
    %c0_55 = arith.constant 0 : index
    %75 = vector.load %arg8[%c15_54, %c0_55] : memref<32x32xf32, #tpu.memory_space<vmem>>, vector<1x32xf32>
    tpu.vector_store %arg8[%c15_54, %c0_55], %74 {strides = array<i32>} : memref<32x32xf32, #tpu.memory_space<vmem>>, vector<1x32xf32>,
    %c16 = arith.constant 16 : index
    %76 = memref.load %arg0[%c16] : memref<32xi32, #tpu.memory_space<smem>>
    %77 = arith.index_cast %76 : i32 to index
    %c0_56 = arith.constant 0 : index
    %78 = vector.load %arg7[%77, %c0_56] : memref<80x32xf32, #tpu.memory_space<vmem>>, vector<1x32xf32>
    %c16_57 = arith.constant 16 : index
    %c0_58 = arith.constant 0 : index
    %79 = vector.load %arg8[%c16_57, %c0_58] : memref<32x32xf32, #tpu.memory_space<vmem>>, vector<1x32xf32>
    tpu.vector_store %arg8[%c16_57, %c0_58], %78 {strides = array<i32>} : memref<32x32xf32, #tpu.memory_space<vmem>>, vector<1x32xf32>,
    %c17 = arith.constant 17 : index
    %80 = memref.load %arg0[%c17] : memref<32xi32, #tpu.memory_space<smem>>
    %81 = arith.index_cast %80 : i32 to index
    %c0_59 = arith.constant 0 : index
    %82 = vector.load %arg7[%81, %c0_59] : memref<80x32xf32, #tpu.memory_space<vmem>>, vector<1x32xf32>
    %c17_60 = arith.constant 17 : index
    %c0_61 = arith.constant 0 : index
    %83 = vector.load %arg8[%c17_60, %c0_61] : memref<32x32xf32, #tpu.memory_space<vmem>>, vector<1x32xf32>
    tpu.vector_store %arg8[%c17_60, %c0_61], %82 {strides = array<i32>} : memref<32x32xf32, #tpu.memory_space<vmem>>, vector<1x32xf32>,
    %c18 = arith.constant 18 : index
    %84 = memref.load %arg0[%c18] : memref<32xi32, #tpu.memory_space<smem>>
    %85 = arith.index_cast %84 : i32 to index
    %c0_62 = arith.constant 0 : index
    %86 = vector.load %arg7[%85, %c0_62] : memref<80x32xf32, #tpu.memory_space<vmem>>, vector<1x32xf32>
    %c18_63 = arith.constant 18 : index
    %c0_64 = arith.constant 0 : index
    %87 = vector.load %arg8[%c18_63, %c0_64] : memref<32x32xf32, #tpu.memory_space<vmem>>, vector<1x32xf32>
    tpu.vector_store %arg8[%c18_63, %c0_64], %86 {strides = array<i32>} : memref<32x32xf32, #tpu.memory_space<vmem>>, vector<1x32xf32>,
    %c19 = arith.constant 19 : index
    %88 = memref.load %arg0[%c19] : memref<32xi32, #tpu.memory_space<smem>>
    %89 = arith.index_cast %88 : i32 to index
    %c0_65 = arith.constant 0 : index
    %90 = vector.load %arg7[%89, %c0_65] : memref<80x32xf32, #tpu.memory_space<vmem>>, vector<1x32xf32>
    %c19_66 = arith.constant 19 : index
    %c0_67 = arith.constant 0 : index
    %91 = vector.load %arg8[%c19_66, %c0_67] : memref<32x32xf32, #tpu.memory_space<vmem>>, vector<1x32xf32>
    tpu.vector_store %arg8[%c19_66, %c0_67], %90 {strides = array<i32>} : memref<32x32xf32, #tpu.memory_space<vmem>>, vector<1x32xf32>,
    %c20 = arith.constant 20 : index
    %92 = memref.load %arg0[%c20] : memref<32xi32, #tpu.memory_space<smem>>
    %93 = arith.index_cast %92 : i32 to index
    %c0_68 = arith.constant 0 : index
    %94 = vector.load %arg7[%93, %c0_68] : memref<80x32xf32, #tpu.memory_space<vmem>>, vector<1x32xf32>
    %c20_69 = arith.constant 20 : index
    %c0_70 = arith.constant 0 : index
    %95 = vector.load %arg8[%c20_69, %c0_70] : memref<32x32xf32, #tpu.memory_space<vmem>>, vector<1x32xf32>
    tpu.vector_store %arg8[%c20_69, %c0_70], %94 {strides = array<i32>} : memref<32x32xf32, #tpu.memory_space<vmem>>, vector<1x32xf32>,
    %c21 = arith.constant 21 : index
    %96 = memref.load %arg0[%c21] : memref<32xi32, #tpu.memory_space<smem>>
    %97 = arith.index_cast %96 : i32 to index
    %c0_71 = arith.constant 0 : index
    %98 = vector.load %arg7[%97, %c0_71] : memref<80x32xf32, #tpu.memory_space<vmem>>, vector<1x32xf32>
    %c21_72 = arith.constant 21 : index
    %c0_73 = arith.constant 0 : index
    %99 = vector.load %arg8[%c21_72, %c0_73] : memref<32x32xf32, #tpu.memory_space<vmem>>, vector<1x32xf32>
    tpu.vector_store %arg8[%c21_72, %c0_73], %98 {strides = array<i32>} : memref<32x32xf32, #tpu.memory_space<vmem>>, vector<1x32xf32>,
    %c22 = arith.constant 22 : index
    %100 = memref.load %arg0[%c22] : memref<32xi32, #tpu.memory_space<smem>>
    %101 = arith.index_cast %100 : i32 to index
    %c0_74 = arith.constant 0 : index
    %102 = vector.load %arg7[%101, %c0_74] : memref<80x32xf32, #tpu.memory_space<vmem>>, vector<1x32xf32>
    %c22_75 = arith.constant 22 : index
    %c0_76 = arith.constant 0 : index
    %103 = vector.load %arg8[%c22_75, %c0_76] : memref<32x32xf32, #tpu.memory_space<vmem>>, vector<1x32xf32>
    tpu.vector_store %arg8[%c22_75, %c0_76], %102 {strides = array<i32>} : memref<32x32xf32, #tpu.memory_space<vmem>>, vector<1x32xf32>,
    %c23 = arith.constant 23 : index
    %104 = memref.load %arg0[%c23] : memref<32xi32, #tpu.memory_space<smem>>
    %105 = arith.index_cast %104 : i32 to index
    %c0_77 = arith.constant 0 : index
    %106 = vector.load %arg7[%105, %c0_77] : memref<80x32xf32, #tpu.memory_space<vmem>>, vector<1x32xf32>
    %c23_78 = arith.constant 23 : index
    %c0_79 = arith.constant 0 : index
    %107 = vector.load %arg8[%c23_78, %c0_79] : memref<32x32xf32, #tpu.memory_space<vmem>>, vector<1x32xf32>
    tpu.vector_store %arg8[%c23_78, %c0_79], %106 {strides = array<i32>} : memref<32x32xf32, #tpu.memory_space<vmem>>, vector<1x32xf32>,
    %c24 = arith.constant 24 : index
    %108 = memref.load %arg0[%c24] : memref<32xi32, #tpu.memory_space<smem>>
    %109 = arith.index_cast %108 : i32 to index
    %c0_80 = arith.constant 0 : index
    %110 = vector.load %arg7[%109, %c0_80] : memref<80x32xf32, #tpu.memory_space<vmem>>, vector<1x32xf32>
    %c24_81 = arith.constant 24 : index
    %c0_82 = arith.constant 0 : index
    %111 = vector.load %arg8[%c24_81, %c0_82] : memref<32x32xf32, #tpu.memory_space<vmem>>, vector<1x32xf32>
    tpu.vector_store %arg8[%c24_81, %c0_82], %110 {strides = array<i32>} : memref<32x32xf32, #tpu.memory_space<vmem>>, vector<1x32xf32>,
    %c25 = arith.constant 25 : index
    %112 = memref.load %arg0[%c25] : memref<32xi32, #tpu.memory_space<smem>>
    %113 = arith.index_cast %112 : i32 to index
    %c0_83 = arith.constant 0 : index
    %114 = vector.load %arg7[%113, %c0_83] : memref<80x32xf32, #tpu.memory_space<vmem>>, vector<1x32xf32>
    %c25_84 = arith.constant 25 : index
    %c0_85 = arith.constant 0 : index
    %115 = vector.load %arg8[%c25_84, %c0_85] : memref<32x32xf32, #tpu.memory_space<vmem>>, vector<1x32xf32>
    tpu.vector_store %arg8[%c25_84, %c0_85], %114 {strides = array<i32>} : memref<32x32xf32, #tpu.memory_space<vmem>>, vector<1x32xf32>,
    %c26 = arith.constant 26 : index
    %116 = memref.load %arg0[%c26] : memref<32xi32, #tpu.memory_space<smem>>
    %117 = arith.index_cast %116 : i32 to index
    %c0_86 = arith.constant 0 : index
    %118 = vector.load %arg7[%117, %c0_86] : memref<80x32xf32, #tpu.memory_space<vmem>>, vector<1x32xf32>
    %c26_87 = arith.constant 26 : index
    %c0_88 = arith.constant 0 : index
    %119 = vector.load %arg8[%c26_87, %c0_88] : memref<32x32xf32, #tpu.memory_space<vmem>>, vector<1x32xf32>
    tpu.vector_store %arg8[%c26_87, %c0_88], %118 {strides = array<i32>} : memref<32x32xf32, #tpu.memory_space<vmem>>, vector<1x32xf32>,
    %c27 = arith.constant 27 : index
    %120 = memref.load %arg0[%c27] : memref<32xi32, #tpu.memory_space<smem>>
    %121 = arith.index_cast %120 : i32 to index
    %c0_89 = arith.constant 0 : index
    %122 = vector.load %arg7[%121, %c0_89] : memref<80x32xf32, #tpu.memory_space<vmem>>, vector<1x32xf32>
    %c27_90 = arith.constant 27 : index
    %c0_91 = arith.constant 0 : index
    %123 = vector.load %arg8[%c27_90, %c0_91] : memref<32x32xf32, #tpu.memory_space<vmem>>, vector<1x32xf32>
    tpu.vector_store %arg8[%c27_90, %c0_91], %122 {strides = array<i32>} : memref<32x32xf32, #tpu.memory_space<vmem>>, vector<1x32xf32>,
    %c28 = arith.constant 28 : index
    %124 = memref.load %arg0[%c28] : memref<32xi32, #tpu.memory_space<smem>>
    %125 = arith.index_cast %124 : i32 to index
    %c0_92 = arith.constant 0 : index
    %126 = vector.load %arg7[%125, %c0_92] : memref<80x32xf32, #tpu.memory_space<vmem>>, vector<1x32xf32>
    %c28_93 = arith.constant 28 : index
    %c0_94 = arith.constant 0 : index
    %127 = vector.load %arg8[%c28_93, %c0_94] : memref<32x32xf32, #tpu.memory_space<vmem>>, vector<1x32xf32>
    tpu.vector_store %arg8[%c28_93, %c0_94], %126 {strides = array<i32>} : memref<32x32xf32, #tpu.memory_space<vmem>>, vector<1x32xf32>,
    %c29 = arith.constant 29 : index
    %128 = memref.load %arg0[%c29] : memref<32xi32, #tpu.memory_space<smem>>
    %129 = arith.index_cast %128 : i32 to index
    %c0_95 = arith.constant 0 : index
    %130 = vector.load %arg7[%129, %c0_95] : memref<80x32xf32, #tpu.memory_space<vmem>>, vector<1x32xf32>
    %c29_96 = arith.constant 29 : index
    %c0_97 = arith.constant 0 : index
    %131 = vector.load %arg8[%c29_96, %c0_97] : memref<32x32xf32, #tpu.memory_space<vmem>>, vector<1x32xf32>
    tpu.vector_store %arg8[%c29_96, %c0_97], %130 {strides = array<i32>} : memref<32x32xf32, #tpu.memory_space<vmem>>, vector<1x32xf32>,
    %c30 = arith.constant 30 : index
    %132 = memref.load %arg0[%c30] : memref<32xi32, #tpu.memory_space<smem>>
    %133 = arith.index_cast %132 : i32 to index
    %c0_98 = arith.constant 0 : index
    %134 = vector.load %arg7[%133, %c0_98] : memref<80x32xf32, #tpu.memory_space<vmem>>, vector<1x32xf32>
    %c30_99 = arith.constant 30 : index
    %c0_100 = arith.constant 0 : index
    %135 = vector.load %arg8[%c30_99, %c0_100] : memref<32x32xf32, #tpu.memory_space<vmem>>, vector<1x32xf32>
    tpu.vector_store %arg8[%c30_99, %c0_100], %134 {strides = array<i32>} : memref<32x32xf32, #tpu.memory_space<vmem>>, vector<1x32xf32>,
    %c31 = arith.constant 31 : index
    %136 = memref.load %arg0[%c31] : memref<32xi32, #tpu.memory_space<smem>>
    %137 = arith.index_cast %136 : i32 to index
    %c0_101 = arith.constant 0 : index
    %138 = vector.load %arg7[%137, %c0_101] : memref<80x32xf32, #tpu.memory_space<vmem>>, vector<1x32xf32>
    %c31_102 = arith.constant 31 : index
    %c0_103 = arith.constant 0 : index
    %139 = vector.load %arg8[%c31_102, %c0_103] : memref<32x32xf32, #tpu.memory_space<vmem>>, vector<1x32xf32>
    tpu.vector_store %arg8[%c31_102, %c0_103], %138 {strides = array<i32>} : memref<32x32xf32, #tpu.memory_space<vmem>>, vector<1x32xf32>,
    %c0_104 = arith.constant 0 : index
    %c0_105 = arith.constant 0 : index
    %140 = vector.load %arg8[%c0_104, %c0_105] : memref<32x32xf32, #tpu.memory_space<vmem>>, vector<32x32xf32>
    %141 = vector.extract_strided_slice %140 {offsets = [0, 0], sizes = [8, 32], strides = [1, 1]} : vector<32x32xf32> to vector<8x32xf32>
    %142 = vector.extract_strided_slice %140 {offsets = [8, 0], sizes = [8, 32], strides = [1, 1]} : vector<32x32xf32> to vector<8x32xf32>
    %143 = vector.extract_strided_slice %140 {offsets = [16, 0], sizes = [16, 32], strides = [1, 1]} : vector<32x32xf32> to vector<16x32xf32>
    %144 = vector.extract_strided_slice %0 {offsets = [64, 0], sizes = [16, 32], strides = [1, 1]} : vector<80x32xf32> to vector<16x32xf32>
    %c0_106 = arith.constant 0 : index
    %c0_107 = arith.constant 0 : index
    %145 = vector.load %arg4[%c0_106, %c0_107] : memref<8x16xf32, #tpu.memory_space<vmem>>, vector<8x16xf32>
    %cst_108 = arith.constant dense<0.000000e+00> : vector<8x32xf32>
    %146 = tpu.matmul %145, %144, %cst_108 {dimension_numbers = #tpu.dot_dimension_numbers<[1], [0], [0], [1], [0, 0, 1, 1], [], []>} : vector<8x16xf32>, vector<16x32xf32>, vector<8x32xf32> -> vector<8x32xf32>
    %147 = arith.addf %141, %146 : vector<8x32xf32>
    %148 = arith.mulf %147, %142 : vector<8x32xf32>
    %cst_109 = arith.constant dense<0.000000e+00> : vector<8xf32>
    %149 = vector.multi_reduction <add>, %148, %cst_109 [1] : vector<8x32xf32> to vector<8xf32>
    %150 = vector.shape_cast %149 : vector<8xf32> to vector<8x1xf32>
    %151 = tpu.concatenate %147, %147 in 0 : vector<8x32xf32>, vector<8x32xf32> -> vector<16x32xf32>
    %152 = tpu.concatenate %150, %150 in 0 : vector<8x1xf32>, vector<8x1xf32> -> vector<16x1xf32>
    %153 = arith.mulf %151, %143 : vector<16x32xf32>
    %cst_110 = arith.constant dense<0.000000e+00> : vector<16xf32>
    %154 = vector.multi_reduction <add>, %153, %cst_110 [1] : vector<16x32xf32> to vector<16xf32>
    %155 = vector.shape_cast %154 : vector<16xf32> to vector<16x1xf32>
    %156 = arith.subf %155, %152 : vector<16x1xf32>
    %cst_111 = arith.constant 0.000000e+00 : f32
    %157 = vector.broadcast %cst_111 : f32 to vector<16x1xf32>
    %158 = arith.maximumf %156, %157 : vector<16x1xf32>
    %159 = math.absf %156 : vector<16x1xf32>
    %cst_112 = arith.constant 0.000000e+00 : f32
    %160 = vector.broadcast %cst_112 : f32 to vector<16x1xf32>
    %161 = arith.subf %160, %159 : vector<16x1xf32>
    %162 = math.exp %161 : vector<16x1xf32>
    %cst_113 = arith.constant 1.000000e+00 : f32
    %163 = vector.broadcast %cst_113 : f32 to vector<16x1xf32>
    %164 = arith.addf %163, %162 : vector<16x1xf32>
    %165 = math.log %164 : vector<16x1xf32>
    %166 = arith.addf %158, %165 : vector<16x1xf32>
    %167 = vector.shape_cast %166 : vector<16x1xf32> to vector<1x16x1xf32>
    %cst_114 = arith.constant dense<0.000000e+00> : vector<1xf32>
    %168 = vector.multi_reduction <add>, %167, %cst_114 [1, 2] : vector<1x16x1xf32> to vector<1xf32>
    %169 = vector.shape_cast %168 : vector<1xf32> to vector<1x1x1xf32>
    %170 = vector.extract %169[0, 0, 0] : f32 from vector<1x1x1xf32>
    %cst_115 = arith.constant 1.600000e+01 : f32
    %171 = arith.divf %170, %cst_115 : f32
    %172 = vector.extract_strided_slice %140 {offsets = [0, 0], sizes = [16, 32], strides = [1, 1]} : vector<32x32xf32> to vector<16x32xf32>
    %c0_116 = arith.constant 0 : index
    %c0_117 = arith.constant 0 : index
    %173 = vector.load %arg5[%c0_116, %c0_117] : memref<32x16xf32, #tpu.memory_space<vmem>>, vector<32x16xf32>
    %cst_118 = arith.constant dense<0.000000e+00> : vector<16x16xf32>
    %174 = tpu.matmul %172, %173, %cst_118 {dimension_numbers = #tpu.dot_dimension_numbers<[1], [0], [0], [1], [0, 0, 1, 1], [], []>} : vector<16x32xf32>, vector<32x16xf32>, vector<16x16xf32> -> vector<16x16xf32>
    %cst_119 = arith.constant dense<0xFF800000> : vector<16xf32>
    %175 = vector.multi_reduction <maximumf>, %174, %cst_119 [1] : vector<16x16xf32> to vector<16xf32>
    %176 = vector.shape_cast %175 : vector<16xf32> to vector<16x1xf32>
    %177 = vector.broadcast %176 : vector<16x1xf32> to vector<16x16xf32>
    %178 = arith.subf %174, %177 : vector<16x16xf32>
    %179 = math.exp %178 : vector<16x16xf32>
    %cst_120 = arith.constant dense<0.000000e+00> : vector<16xf32>
    %180 = vector.multi_reduction <add>, %179, %cst_120 [1] : vector<16x16xf32> to vector<16xf32>
    %181 = vector.shape_cast %180 : vector<16xf32> to vector<16x1xf32>
    %182 = tpu.reciprocal %181 {approx = true} : vector<16x1xf32> -> vector<16x1xf32>
    %183 = vector.broadcast %182 : vector<16x1xf32> to vector<16x16xf32>
    %184 = arith.mulf %179, %183 : vector<16x16xf32>
    %185 = vector.extract_strided_slice %184 {offsets = [0, 0], sizes = [8, 16], strides = [1, 1]} : vector<16x16xf32> to vector<8x16xf32>
    %186 = vector.extract_strided_slice %184 {offsets = [8, 0], sizes = [8, 16], strides = [1, 1]} : vector<16x16xf32> to vector<8x16xf32>
    %187 = arith.mulf %185, %186 : vector<8x16xf32>
    %cst_121 = arith.constant 1.000000e-07 : f32
    %188 = vector.broadcast %cst_121 : f32 to vector<8x16xf32>
    %189 = arith.addf %187, %188 : vector<8x16xf32>
    %190 = math.log %189 : vector<8x16xf32>
    %cst_122 = arith.constant 0.000000e+00 : f32
    %191 = vector.broadcast %cst_122 : f32 to vector<8x16xf32>
    %192 = arith.subf %191, %190 : vector<8x16xf32>
    %193 = arith.mulf %145, %192 : vector<8x16xf32>
    %194 = vector.shape_cast %193 : vector<8x16xf32> to vector<1x8x16xf32>
    %cst_123 = arith.constant dense<0.000000e+00> : vector<1xf32>
    %195 = vector.multi_reduction <add>, %194, %cst_123 [1, 2] : vector<1x8x16xf32> to vector<1xf32>
    %196 = vector.shape_cast %195 : vector<1xf32> to vector<1x1x1xf32>
    %197 = vector.extract %196[0, 0, 0] : f32 from vector<1x1x1xf32>
    %c0_124 = arith.constant 0 : index
    %198 = memref.load %arg1[%c0_124] : memref<2xf32, #tpu.memory_space<smem>>
    %c1_125 = arith.constant 1 : index
    %199 = memref.load %arg1[%c1_125] : memref<2xf32, #tpu.memory_space<smem>>
    %200 = arith.mulf %197, %199 : f32
    %201 = arith.mulf %198, %198 : f32
    %cst_126 = arith.constant 1.000000e+00 : f32
    %202 = arith.maximumf %201, %cst_126 : f32
    %203 = arith.divf %200, %202 : f32
    %cst_127 = arith.constant 1.000000e-01 : f32
    %204 = arith.mulf %cst_127, %203 : f32
    %205 = arith.addf %171, %204 : f32
    %c0_128 = arith.constant 0 : index
    %c0_129 = arith.constant 0 : index
    %206 = memref.load %arg6[%c0_128, %c0_129] : memref<1x1xf32, #tpu.memory_space<smem>>
    memref.store %205, %arg6[%c0_128, %c0_129] : memref<1x1xf32, #tpu.memory_space<smem>>
    return
  }
}

</mosaic_0001>

<llo_original>
// kernel: hypersar_forward.1
$region0: #{hypersar_forward.1}
  #allocation0 [shape = 'u32[]', space=smem, size = 0x4, offset = 0x4, fixed_abs, tag = 'smem constant byte address 0x4 - core index']
  #allocation1 [shape = 'u32[72,128]{1,0:T(1,128)}', space=vmem, size = 0x9000, scoped, tag = 'internal scratch']
  #allocation2 [shape = 'f32[80,32]{1,0:T(8,128)}', space=vmem, size = 0xa000, scoped, tag = 'scratch operand']
  #allocation3 [shape = 'f32[32,32]{1,0:T(8,128)}', space=vmem, size = 0x4000, scoped, tag = 'scratch operand']
  %s0 = inlined_call_operand.vmem [shape: s32[32], index: 0, kind: input, shape index: {}]
  %s1 = inlined_call_operand.vmem [shape: f32[2], index: 1, kind: input, shape index: {}]
  %s2 = inlined_call_operand.vmem [shape: f32[80,80], index: 2, kind: input, shape index: {}]
  %s3 = inlined_call_operand.vmem [shape: f32[80,32], index: 3, kind: input, shape index: {}]
  %s4 = inlined_call_operand.vmem [shape: f32[8,16], index: 4, kind: input, shape index: {}]
  %s5 = inlined_call_operand.vmem [shape: f32[32,16], index: 5, kind: input, shape index: {}]
  %s6 = inlined_call_operand.hbm [shape: f32[1,1], index: 6, kind: output, shape index: {}]
  %s7 = sld [smem:[#allocation0]]
  $region42: #{hypersar_forward.1} parent=0
    _
  %s9 = ssub.s32 1, %s7
  %s10 = scalar_select 0, %s9, %s7
  $region1: #{hypersar_forward.1} parent=0
    #allocation4 [shape = 'u8[512]{0}', space=smem, size = 0x200, scoped, tag = 'input window, operand 0, single buffered']
    #allocation5 [shape = 's32[1]{0}', space=sflag, size = 0x4, scoped, tag = 'scoped memory for hypersar_forward.1']
    #allocation6 [shape = 's32[1]{0}', space=sflag, size = 0x4, scoped, tag = 'scoped memory for hypersar_forward.1']
    #allocation7 [shape = 'u8[512]{0}', space=smem, size = 0x200, scoped, tag = 'input window, operand 1, single buffered']
    #allocation8 [shape = 's32[1]{0}', space=sflag, size = 0x4, scoped, tag = 'scoped memory for hypersar_forward.1']
    #allocation9 [shape = 'u8[512]{0}', space=smem, size = 0x200, scoped, tag = 'output window, operand 0, single buffered']
    %11 = vsyncpa [#allocation6], 0
    %12 = vsyncpa [#allocation8], 0
    %13 = vsyncpa [#allocation5], 0
    // Predicated region
    $region2: #{hypersar_forward.1} parent=1 // pred_check
      _
    $region3: #{hypersar_forward.1} parent=1 // pred_check_branch
      %15 = sbr.rel (0) target = $region5
    $region4: #{hypersar_forward.1} parent=1 // pred_region
      %17 = vsyncadd [#allocation6], 0
      %s19 = sshll.u32 %s0, 4
      %s20 = int_to_ptr.vmem [resolvable:$true] %s19
      %22 = dma.vmem_to_smem %s20, 16, [#allocation4], [#allocation6]
    $region5: #{hypersar_forward.1} parent=1 // pred_fallthru
      _
    // Predicated region
    $region6: #{hypersar_forward.1} parent=1 // pred_check
      _
    $region7: #{hypersar_forward.1} parent=1 // pred_check_branch
      %24 = sbr.rel (0) target = $region9
    $region8: #{hypersar_forward.1} parent=1 // pred_region
      %26 = vsyncadd [#allocation8], 0
      %s28 = sshll.u32 %s1, 4
      %s29 = int_to_ptr.vmem [resolvable:$true] %s28
      %31 = dma.vmem_to_smem %s29, 16, [#allocation7], [#allocation8]
    $region9: #{hypersar_forward.1} parent=1 // pred_fallthru
      _
    // Predicated region
    $region10: #{hypersar_forward.1} parent=1 // pred_check
      _
    $region11: #{hypersar_forward.1} parent=1 // pred_check_branch
      %33 = sbr.rel (0) target = $region13
    $region12: #{hypersar_forward.1} parent=1 // pred_region
      _
    $region13: #{hypersar_forward.1} parent=1 // pred_fallthru
      _
    // Predicated region
    $region14: #{hypersar_forward.1} parent=1 // pred_check
      _
    $region15: #{hypersar_forward.1} parent=1 // pred_check_branch
      %35 = sbr.rel (0) target = $region17
    $region16: #{hypersar_forward.1} parent=1 // pred_region
      _
    $region17: #{hypersar_forward.1} parent=1 // pred_fallthru
      _
    // Predicated region
    $region18: #{hypersar_forward.1} parent=1 // pred_check
      _
    $region19: #{hypersar_forward.1} parent=1 // pred_check_branch
      %37 = sbr.rel (0) target = $region21
    $region20: #{hypersar_forward.1} parent=1 // pred_region
      _
    $region21: #{hypersar_forward.1} parent=1 // pred_fallthru
      _
    // Predicated region
    $region22: #{hypersar_forward.1} parent=1 // pred_check
      _
    $region23: #{hypersar_forward.1} parent=1 // pred_check_branch
      %39 = sbr.rel (0) target = $region25
    $region24: #{hypersar_forward.1} parent=1 // pred_region
      _
    $region25: #{hypersar_forward.1} parent=1 // pred_fallthru
      _
    // Predicated region
    $region26: #{hypersar_forward.1} parent=1 // pred_check
      _
    $region27: #{hypersar_forward.1} parent=1 // pred_check_branch
      %41 = sbr.rel (0) target = $region29
    $region28: #{hypersar_forward.1} parent=1 // pred_region
      %43 = dma.done [#allocation6], 16
    $region29: #{hypersar_forward.1} parent=1 // pred_fallthru
      _
    // Predicated region
    $region30: #{hypersar_forward.1} parent=1 // pred_check
      _
    $region31: #{hypersar_forward.1} parent=1 // pred_check_branch
      %45 = sbr.rel (0) target = $region33
    $region32: #{hypersar_forward.1} parent=1 // pred_region
      %47 = dma.done [#allocation8], 16
    $region33: #{hypersar_forward.1} parent=1 // pred_fallthru
      _
    %48 = sfence
    %v50 = vld [vmem:[%s3] sm:$0xff]
    %v51 = vld [vmem:[%s3 + $0x8] sm:$0xff]
    %v52 = vld [vmem:[%s3 + $0x10] sm:$0xff]
    %v53 = vld [vmem:[%s3 + $0x18] sm:$0xff]
    %v54 = vld [vmem:[%s3 + $0x20] sm:$0xff]
    %v55 = vld [vmem:[%s3 + $0x28] sm:$0xff]
    %v56 = vld [vmem:[%s3 + $0x30] sm:$0xff]
    %v57 = vld [vmem:[%s3 + $0x38] sm:$0xff]
    %v58 = vld [vmem:[%s3 + $0x40] sm:$0xff]
    %v59 = vld [vmem:[%s3 + $0x48] sm:$0xff]
    %v60 = vld [vmem:[%s2] sm:$0xff]
    %v61 = vld [vmem:[%s2 + $0x8] sm:$0xff]
    %v62 = vld [vmem:[%s2 + $0x10] sm:$0xff]
    %v63 = vld [vmem:[%s2 + $0x18] sm:$0xff]
    %v64 = vld [vmem:[%s2 + $0x20] sm:$0xff]
    %v65 = vld [vmem:[%s2 + $0x28] sm:$0xff]
    %v66 = vld [vmem:[%s2 + $0x30] sm:$0xff]
    %v67 = vld [vmem:[%s2 + $0x38] sm:$0xff]
    %v68 = vld [vmem:[%s2 + $0x40] sm:$0xff]
    %v69 = vld [vmem:[%s2 + $0x48] sm:$0xff]
    %v70 = vpack.c.bf16 %v61, %v60
    %v71 = vpack.c.bf16 %v63, %v62
    %v72 = vpack.c.bf16 %v65, %v64
    %v73 = vpack.c.bf16 %v67, %v66
    %v74 = vpack.c.bf16 %v69, %v68
    %v75 = vpack.c.bf16 %v51, %v50
    %v76 = vpack.c.bf16 %v53, %v52
    %v77 = vpack.c.bf16 %v55, %v54
    %v78 = vpack.c.bf16 %v57, %v56
    %v79 = vpack.c.bf16 %v59, %v58
    %vm80 = vcmask 654336
    %v82 = vsel %vm80, %v70, 0
    %v85 = vsel %vm80, %v71, 0
    %v88 = vsel %vm80, %v72, 0
    %v91 = vsel %vm80, %v73, 0
    %v94 = vsel %vm80, %v74, 0
    %96 = vmatpush.bf16.msra.mxu0 0
    %97 = vmatpush.bf16.msra.mxu0 0
    %98 = vmatpush.bf16.msra.mxu0 0
    %99 = vmatpush.bf16.msra.mxu0 %v79
    %100 = vmatpush.bf16.msra.mxu0 %v78
    %101 = vmatpush.bf16.msra.mxu0 %v77
    %102 = vmatpush.bf16.msra.mxu0 %v76
    %103 = vmatpush.bf16.msra.mxu0 %v75
    %104 = vmatmul.bf16.gmra.mxu0 %v82
    %v105 = vpop.f32.mrf.mxu0
    %v106 = vadd.f32 0.0, %v105
    %v107 = vpop.f32.mrf.mxu0
    %v108 = vadd.f32 0.0, %v107
    %109 = vmatmul.bf16.gmra.mxu0 %v85
    %v110 = vpop.f32.mrf.mxu0
    %v111 = vadd.f32 0.0, %v110
    %v112 = vpop.f32.mrf.mxu0
    %v113 = vadd.f32 0.0, %v112
    %114 = vmatmul.bf16.gmra.mxu0 %v88
    %v115 = vpop.f32.mrf.mxu0
    %v116 = vadd.f32 0.0, %v115
    %v117 = vpop.f32.mrf.mxu0
    %v118 = vadd.f32 0.0, %v117
    %119 = vmatmul.bf16.gmra.mxu0 %v91
    %v120 = vpop.f32.mrf.mxu0
    %v121 = vadd.f32 0.0, %v120
    %v122 = vpop.f32.mrf.mxu0
    %v123 = vadd.f32 0.0, %v122
    %124 = vmatmul.bf16.gmra.mxu0 %v94
    %v125 = vpop.f32.mrf.mxu0
    %v126 = vadd.f32 0.0, %v125
    %v127 = vpop.f32.mrf.mxu0
    %v128 = vadd.f32 0.0, %v127
    %129 = vdwg.mxu0
    %v130 = vadd.f32 %v50, %v106
    %v131 = vadd.f32 %v51, %v108
    %v132 = vadd.f32 %v52, %v111
    %v133 = vadd.f32 %v53, %v113
    %v134 = vadd.f32 %v54, %v116
    %v135 = vadd.f32 %v55, %v118
    %v136 = vadd.f32 %v56, %v121
    %v137 = vadd.f32 %v57, %v123
    %v138 = vadd.f32 %v58, %v126
    %v139 = vadd.f32 %v59, %v128
    %v140 = vpack.c.bf16 %v108, %v106
    %v141 = vpack.c.bf16 %v113, %v111
    %v142 = vpack.c.bf16 %v118, %v116
    %v143 = vpack.c.bf16 %v123, %v121
    %v144 = vpack.c.bf16 %v128, %v126
    %145 = vmatpush.bf16.msra.mxu0 0
    %146 = vmatpush.bf16.msra.mxu0 0
    %147 = vmatpush.bf16.msra.mxu0 0
    %148 = vmatpush.bf16.msra.mxu0 %v144
    %149 = vmatpush.bf16.msra.mxu0 %v143
    %150 = vmatpush.bf16.msra.mxu0 %v142
    %151 = vmatpush.bf16.msra.mxu0 %v141
    %152 = vmatpush.bf16.msra.mxu0 %v140
    %153 = vmatmul.bf16.gmra.mxu0 %v82
    %v154 = vpop.f32.mrf.mxu0
    %v155 = vadd.f32 0.0, %v154
    %v156 = vpop.f32.mrf.mxu0
    %v157 = vadd.f32 0.0, %v156
    %158 = vmatmul.bf16.gmra.mxu0 %v85
    %v159 = vpop.f32.mrf.mxu0
    %v160 = vadd.f32 0.0, %v159
    %v161 = vpop.f32.mrf.mxu0
    %v162 = vadd.f32 0.0, %v161
    %163 = vmatmul.bf16.gmra.mxu0 %v88
    %v164 = vpop.f32.mrf.mxu0
    %v165 = vadd.f32 0.0, %v164
    %v166 = vpop.f32.mrf.mxu0
    %v167 = vadd.f32 0.0, %v166
    %168 = vmatmul.bf16.gmra.mxu0 %v91
    %v169 = vpop.f32.mrf.mxu0
    %v170 = vadd.f32 0.0, %v169
    %v171 = vpop.f32.mrf.mxu0
    %v172 = vadd.f32 0.0, %v171
    %173 = vmatmul.bf16.gmra.mxu0 %v94
    %v174 = vpop.f32.mrf.mxu0
    %v175 = vadd.f32 0.0, %v174
    %v176 = vpop.f32.mrf.mxu0
    %v177 = vadd.f32 0.0, %v176
    %178 = vdwg.mxu0
    %v179 = vadd.f32 %v130, %v155
    %v180 = vadd.f32 %v131, %v157
    %v181 = vadd.f32 %v132, %v160
    %v182 = vadd.f32 %v133, %v162
    %v183 = vadd.f32 %v134, %v165
    %v184 = vadd.f32 %v135, %v167
    %v185 = vadd.f32 %v136, %v170
    %v186 = vadd.f32 %v137, %v172
    %v187 = vadd.f32 %v138, %v175
    %v188 = vadd.f32 %v139, %v177
    %v189 = vmul.f32 %v179, 0.33333334
    %v190 = vmul.f32 %v180, 0.33333334
    %v191 = vmul.f32 %v181, 0.33333334
    %v192 = vmul.f32 %v182, 0.33333334
    %v193 = vmul.f32 %v183, 0.33333334
    %v194 = vmul.f32 %v184, 0.33333334
    %v195 = vmul.f32 %v185, 0.33333334
    %v196 = vmul.f32 %v186, 0.33333334
    %v197 = vmul.f32 %v187, 0.33333334
    %v198 = vmul.f32 %v188, 0.33333334
    %vm199 = vcmask 261120
    %200 = vst.msk [vmem:[#allocation2] sm:$0xff] %vm199, %v189
    %201 = vst.msk [vmem:[#allocation2 + $0x8] sm:$0xff] %vm199, %v190
    %202 = vst.msk [vmem:[#allocation2 + $0x10] sm:$0xff] %vm199, %v191
    %203 = vst.msk [vmem:[#allocation2 + $0x18] sm:$0xff] %vm199, %v192
    %204 = vst.msk [vmem:[#allocation2 + $0x20] sm:$0xff] %vm199, %v193
    %205 = vst.msk [vmem:[#allocation2 + $0x28] sm:$0xff] %vm199, %v194
    %206 = vst.msk [vmem:[#allocation2 + $0x30] sm:$0xff] %vm199, %v195
    %207 = vst.msk [vmem:[#allocation2 + $0x38] sm:$0xff] %vm199, %v196
    %208 = vst.msk [vmem:[#allocation2 + $0x40] sm:$0xff] %vm199, %v197
    %209 = vst.msk [vmem:[#allocation2 + $0x48] sm:$0xff] %vm199, %v198
    %s210 = sld [smem:[#allocation4]]
    %s211 = scalar_lea.vmem [#allocation2], %s210
    %v212 = vld [vmem:[%s211] sm:$0x1]
    %vm213 = vcmask 253952
    %214 = vst.msk [vmem:[#allocation3] sm:$0x1] %vm213, %v212
    %s215 = sld [smem:[#allocation4 + $0x1]]
    %s216 = scalar_lea.vmem [#allocation2], %s215
    %v217 = vld [vmem:[%s216] sm:$0x1]
    %218 = vst.msk [vmem:[#allocation3 + $0x1] sm:$0x1] %vm213, %v217
    %s219 = sld [smem:[#allocation4 + $0x2]]
    %s220 = scalar_lea.vmem [#allocation2], %s219
    %v221 = vld [vmem:[%s220] sm:$0x1]
    %222 = vst.msk [vmem:[#allocation3 + $0x2] sm:$0x1] %vm213, %v221
    %s223 = sld [smem:[#allocation4 + $0x3]]
    %s224 = scalar_lea.vmem [#allocation2], %s223
    %v225 = vld [vmem:[%s224] sm:$0x1]
    %226 = vst.msk [vmem:[#allocation3 + $0x3] sm:$0x1] %vm213, %v225
    %s227 = sld [smem:[#allocation4 + $0x4]]
    %s228 = scalar_lea.vmem [#allocation2], %s227
    %v229 = vld [vmem:[%s228] sm:$0x1]
    %230 = vst.msk [vmem:[#allocation3 + $0x4] sm:$0x1] %vm213, %v229
    %s231 = sld [smem:[#allocation4 + $0x5]]
    %s232 = scalar_lea.vmem [#allocation2], %s231
    %v233 = vld [vmem:[%s232] sm:$0x1]
    %234 = vst.msk [vmem:[#allocation3 + $0x5] sm:$0x1] %vm213, %v233
    %s235 = sld [smem:[#allocation4 + $0x6]]
    %s236 = scalar_lea.vmem [#allocation2], %s235
    %v237 = vld [vmem:[%s236] sm:$0x1]
    %238 = vst.msk [vmem:[#allocation3 + $0x6] sm:$0x1] %vm213, %v237
    %s239 = sld [smem:[#allocation4 + $0x7]]
    %s240 = scalar_lea.vmem [#allocation2], %s239
    %v241 = vld [vmem:[%s240] sm:$0x1]
    %242 = vst.msk [vmem:[#allocation3 + $0x7] sm:$0x1] %vm213, %v241
    %s243 = sld [smem:[#allocation4 + $0x8]]
    %s244 = scalar_lea.vmem [#allocation2], %s243
    %v245 = vld [vmem:[%s244] sm:$0x1]
    %246 = vst.msk [vmem:[#allocation3 + $0x8] sm:$0x1] %vm213, %v245
    %s247 = sld [smem:[#allocation4 + $0x9]]
    %s248 = scalar_lea.vmem [#allocation2], %s247
    %v249 = vld [vmem:[%s248] sm:$0x1]
    %250 = vst.msk [vmem:[#allocation3 + $0x9] sm:$0x1] %vm213, %v249
    %s251 = sld [smem:[#allocation4 + $0xa]]
    %s252 = scalar_lea.vmem [#allocation2], %s251
    %v253 = vld [vmem:[%s252] sm:$0x1]
    %254 = vst.msk [vmem:[#allocation3 + $0xa] sm:$0x1] %vm213, %v253
    %s255 = sld [smem:[#allocation4 + $0xb]]
    %s256 = scalar_lea.vmem [#allocation2], %s255
    %v257 = vld [vmem:[%s256] sm:$0x1]
    %258 = vst.msk [vmem:[#allocation3 + $0xb] sm:$0x1] %vm213, %v257
    %s259 = sld [smem:[#allocation4 + $0xc]]
    %s260 = scalar_lea.vmem [#allocation2], %s259
    %v261 = vld [vmem:[%s260] sm:$0x1]
    %262 = vst.msk [vmem:[#allocation3 + $0xc] sm:$0x1] %vm213, %v261
    %s263 = sld [smem:[#allocation4 + $0xd]]
    %s264 = scalar_lea.vmem [#allocation2], %s263
    %v265 = vld [vmem:[%s264] sm:$0x1]
    %266 = vst.msk [vmem:[#allocation3 + $0xd] sm:$0x1] %vm213, %v265
    %s267 = sld [smem:[#allocation4 + $0xe]]
    %s268 = scalar_lea.vmem [#allocation2], %s267
    %v269 = vld [vmem:[%s268] sm:$0x1]
    %270 = vst.msk [vmem:[#allocation3 + $0xe] sm:$0x1] %vm213, %v269
    %s271 = sld [smem:[#allocation4 + $0xf]]
    %s272 = scalar_lea.vmem [#allocation2], %s271
    %v273 = vld [vmem:[%s272] sm:$0x1]
    %274 = vst.msk [vmem:[#allocation3 + $0xf] sm:$0x1] %vm213, %v273
    %s275 = sld [smem:[#allocation4 + $0x10]]
    %s276 = scalar_lea.vmem [#allocation2], %s275
    %v277 = vld [vmem:[%s276] sm:$0x1]
    %278 = vst.msk [vmem:[#allocation3 + $0x10] sm:$0x1] %vm213, %v277
    %s279 = sld [smem:[#allocation4 + $0x11]]
    %s280 = scalar_lea.vmem [#allocation2], %s279
    %v281 = vld [vmem:[%s280] sm:$0x1]
    %282 = vst.msk [vmem:[#allocation3 + $0x11] sm:$0x1] %vm213, %v281
    %s283 = sld [smem:[#allocation4 + $0x12]]
    %s284 = scalar_lea.vmem [#allocation2], %s283
    %v285 = vld [vmem:[%s284] sm:$0x1]
    %286 = vst.msk [vmem:[#allocation3 + $0x12] sm:$0x1] %vm213, %v285
    %s287 = sld [smem:[#allocation4 + $0x13]]
    %s288 = scalar_lea.vmem [#allocation2], %s287
    %v289 = vld [vmem:[%s288] sm:$0x1]
    %290 = vst.msk [vmem:[#allocation3 + $0x13] sm:$0x1] %vm213, %v289
    %s291 = sld [smem:[#allocation4 + $0x14]]
    %s292 = scalar_lea.vmem [#allocation2], %s291
    %v293 = vld [vmem:[%s292] sm:$0x1]
    %294 = vst.msk [vmem:[#allocation3 + $0x14] sm:$0x1] %vm213, %v293
    %s295 = sld [smem:[#allocation4 + $0x15]]
    %s296 = scalar_lea.vmem [#allocation2], %s295
    %v297 = vld [vmem:[%s296] sm:$0x1]
    %298 = vst.msk [vmem:[#allocation3 + $0x15] sm:$0x1] %vm213, %v297
    %s299 = sld [smem:[#allocation4 + $0x16]]
    %s300 = scalar_lea.vmem [#allocation2], %s299
    %v301 = vld [vmem:[%s300] sm:$0x1]
    %302 = vst.msk [vmem:[#allocation3 + $0x16] sm:$0x1] %vm213, %v301
    %s303 = sld [smem:[#allocation4 + $0x17]]
    %s304 = scalar_lea.vmem [#allocation2], %s303
    %v305 = vld [vmem:[%s304] sm:$0x1]
    %306 = vst.msk [vmem:[#allocation3 + $0x17] sm:$0x1] %vm213, %v305
    %s307 = sld [smem:[#allocation4 + $0x18]]
    %s308 = scalar_lea.vmem [#allocation2], %s307
    %v309 = vld [vmem:[%s308] sm:$0x1]
    %310 = vst.msk [vmem:[#allocation3 + $0x18] sm:$0x1] %vm213, %v309
    %s311 = sld [smem:[#allocation4 + $0x19]]
    %s312 = scalar_lea.vmem [#allocation2], %s311
    %v313 = vld [vmem:[%s312] sm:$0x1]
    %314 = vst.msk [vmem:[#allocation3 + $0x19] sm:$0x1] %vm213, %v313
    %s315 = sld [smem:[#allocation4 + $0x1a]]
    %s316 = scalar_lea.vmem [#allocation2], %s315
    %v317 = vld [vmem:[%s316] sm:$0x1]
    %318 = vst.msk [vmem:[#allocation3 + $0x1a] sm:$0x1] %vm213, %v317
    %s319 = sld [smem:[#allocation4 + $0x1b]]
    %s320 = scalar_lea.vmem [#allocation2], %s319
    %v321 = vld [vmem:[%s320] sm:$0x1]
    %322 = vst.msk [vmem:[#allocation3 + $0x1b] sm:$0x1] %vm213, %v321
    %s323 = sld [smem:[#allocation4 + $0x1c]]
    %s324 = scalar_lea.vmem [#allocation2], %s323
    %v325 = vld [vmem:[%s324] sm:$0x1]
    %326 = vst.msk [vmem:[#allocation3 + $0x1c] sm:$0x1] %vm213, %v325
    %s327 = sld [smem:[#allocation4 + $0x1d]]
    %s328 = scalar_lea.vmem [#allocation2], %s327
    %v329 = vld [vmem:[%s328] sm:$0x1]
    %330 = vst.msk [vmem:[#allocation3 + $0x1d] sm:$0x1] %vm213, %v329
    %s331 = sld [smem:[#allocation4 + $0x1e]]
    %s332 = scalar_lea.vmem [#allocation2], %s331
    %v333 = vld [vmem:[%s332] sm:$0x1]
    %334 = vst.msk [vmem:[#allocation3 + $0x1e] sm:$0x1] %vm213, %v333
    %s335 = sld [smem:[#allocation4 + $0x1f]]
    %s336 = scalar_lea.vmem [#allocation2], %s335
    %v337 = vld [vmem:[%s336] sm:$0x1]
    %338 = vst.msk [vmem:[#allocation3 + $0x1f] sm:$0x1] %vm213, %v337
    %v339 = vld [vmem:[#allocation3] sm:$0xff]
    %v340 = vld [vmem:[#allocation3 + $0x8] sm:$0xff]
    %v341 = vld [vmem:[#allocation3 + $0x10] sm:$0xff]
    %v342 = vld [vmem:[#allocation3 + $0x18] sm:$0xff]
    %v343 = vld [vmem:[%s4] sm:$0xff]
    %vm344 = vcmask 130048
    %v346 = vsel %vm344, %v343, 0
    %348 = vmatpush.msra.mxu0 0.0
    %349 = vmatpush.msra.mxu0 0.0
    %350 = vmatpush.msra.mxu0 0.0
    %351 = vmatpush.msra.mxu0 0.0
    %352 = vmatpush.msra.mxu0 0.0
    %353 = vmatpush.msra.mxu0 0.0
    %354 = vmatpush.msra.mxu0 0.0
    %355 = vmatpush.msra.mxu0 0.0
    %356 = vmatpush.msra.mxu0 0.0
    %357 = vmatpush.msra.mxu0 0.0
    %358 = vmatpush.msra.mxu0 0.0
    %359 = vmatpush.msra.mxu0 0.0
    %360 = vmatpush.msra.mxu0 0.0
    %361 = vmatpush.msra.mxu0 0.0
    %362 = vmatpush.msra.mxu0 %v59
    %363 = vmatpush.msra.mxu0 %v58
    %364 = vmatmul.f32.gmra.mxu0 %v346
    %v365 = vpop.f32.mrf.mxu0
    %v366 = vadd.f32 0.0, %v365
    %367 = vdwg.mxu0
    %v368 = vadd.f32 %v339, %v366
    %v369 = vmul.f32 %v368, %v340
    %v370 = vsel %vm199, %v369, 0.0
    %371 = vadd.xlane.f32.xlu0 %v370
    %v372 = vpop.xlane.xlu0 %371
    %v373 = vmul.f32 %v368, %v341
    %v374 = vmul.f32 %v368, %v342
    %v375 = vsel %vm199, %v373, 0.0
    %376 = vadd.xlane.f32.xlu0 %v375
    %v377 = vpop.xlane.xlu0 %376
    %v378 = vsel %vm199, %v374, 0.0
    %379 = vadd.xlane.f32.xlu0 %v378
    %v380 = vpop.xlane.xlu0 %379
    %v381 = vsub.f32 %v377, %v372
    %v382 = vsub.f32 %v380, %v372
    %v383 = vmax.f32 %v381, 0.0
    %v384 = vmax.f32 %v382, 0.0
    %v385 = vand.u32 2147483647, %v381
    %v386 = vand.u32 2147483647, %v382
    %v387 = vsub.f32 0.0, %v385
    %v388 = vsub.f32 0.0, %v386
    %v389 = vmul.f32 %v387, 1.442695
    %v390 = vpow.pop %v389
    %v391 = vmul.f32 %v388, 1.442695
    %v392 = vpow.pop %v391
    %v393 = vadd.f32 %v390, 1.0
    %v394 = vadd.f32 %v392, 1.0
    %v395 = vlog2.pop %v393
    %v396 = vmul.f32 %v395, 0.6931472
    %v397 = vlog2.pop %v394
    %v398 = vmul.f32 %v397, 0.6931472
    %v399 = vadd.f32 %v383, %v396
    %v400 = vadd.f32 %v384, %v398
    %vm401 = vcmask 7168
    %v402 = vsel %vm401, %v399, 0.0
    %v403 = vsel %vm401, %v400, 0.0
    %v404 = vadd.f32 %v402, %v403
    %405 = vadd.xlane.f32.xlu0 %v404
    %v406 = vpop.xlane.xlu0 %405
    %v407 = vrot.slane %v406, 4
    %v408 = vadd.f32 %v406, %v407
    %v409 = vrot.slane %v408, 2
    %v410 = vadd.f32 %v408, %v409
    %v411 = vrot.slane %v410, 1
    %v412 = vadd.f32 %v410, %v411
    %s413 = vtos %v412
    %v414 = vrcp.pop 16.0
    %v415 = vmul.f32 16.0, %v414
    %v416 = vsub.f32 1.0, %v415
    %v417 = vmul.f32 %v414, %v416
    %v418 = vadd.f32 %v414, %v417
    %vm419 = vweird.f32 %v414
    %v420 = vsel %vm419, %v414, %v418
    %s421 = vtos %v420
    %s422 = smul.f32 %s413, %s421
    %v423 = vld [vmem:[%s5] sm:$0xff]
    %v424 = vld [vmem:[%s5 + $0x8] sm:$0xff]
    %v425 = vld [vmem:[%s5 + $0x10] sm:$0xff]
    %v426 = vld [vmem:[%s5 + $0x18] sm:$0xff]
    %v428 = vsel %vm199, %v339, 0
    %v431 = vsel %vm199, %v340, 0
    %433 = vmatpush.msra.mxu0 0.0
    %434 = vmatpush.msra.mxu0 0.0
    %435 = vmatpush.msra.mxu0 0.0
    %436 = vmatpush.msra.mxu0 0.0
    %437 = vmatpush.msra.mxu0 0.0
    %438 = vmatpush.msra.mxu0 0.0
    %439 = vmatpush.msra.mxu0 0.0
    %440 = vmatpush.msra.mxu0 0.0
    %441 = vmatpush.msra.mxu0 0.0
    %442 = vmatpush.msra.mxu0 0.0
    %443 = vmatpush.msra.mxu0 0.0
    %444 = vmatpush.msra.mxu0 0.0
    %445 = vmatpush.msra.mxu0 %v426
    %446 = vmatpush.msra.mxu0 %v425
    %447 = vmatpush.msra.mxu0 %v424
    %448 = vmatpush.msra.mxu0 %v423
    %449 = vmatmul.f32.gmra.mxu0 %v428
    %v450 = vpop.f32.mrf.mxu0
    %v451 = vadd.f32 0.0, %v450
    %452 = vmatmul.f32.gmra.mxu0 %v431
    %v453 = vpop.f32.mrf.mxu0
    %v454 = vadd.f32 0.0, %v453
    %455 = vdwg.mxu0
    %v456 = vsel %vm344, %v451, -inf
    %457 = vmax.xlane.f32.xlu0 %v456
    %v458 = vpop.xlane.xlu0 %457
    %v459 = vsel %vm344, %v454, -inf
    %460 = vmax.xlane.f32.xlu0 %v459
    %v461 = vpop.xlane.xlu0 %460
    %v462 = vsub.f32 %v451, %v458
    %v463 = vsub.f32 %v454, %v461
    %v464 = vmul.f32 %v462, 1.442695
    %v465 = vpow.pop %v464
    %v466 = vmul.f32 %v463, 1.442695
    %v467 = vpow.pop %v466
    %v468 = vsel %vm344, %v465, 0.0
    %469 = vadd.xlane.f32.xlu0 %v468
    %v470 = vpop.xlane.xlu0 %469
    %v471 = vsel %vm344, %v467, 0.0
    %472 = vadd.xlane.f32.xlu0 %v471
    %v473 = vpop.xlane.xlu0 %472
    %v474 = vrcp.pop %v470
    %v475 = vrcp.pop %v473
    %v476 = vmul.f32 %v465, %v474
    %v477 = vmul.f32 %v467, %v475
    %v478 = vmul.f32 %v476, %v477
    %v479 = vadd.f32 %v478, 1e-07
    %v480 = vlog2.pop %v479
    %v481 = vmul.f32 %v480, 0.6931472
    %v482 = vsub.f32 0.0, %v481
    %v483 = vmul.f32 %v343, %v482
    %v484 = vsel %vm344, %v483, 0.0
    %485 = vadd.xlane.f32.xlu0 %v484
    %v486 = vpop.xlane.xlu0 %485
    %v487 = vrot.slane %v486, 4
    %v488 = vadd.f32 %v486, %v487
    %v489 = vrot.slane %v488, 2
    %v490 = vadd.f32 %v488, %v489
    %v491 = vrot.slane %v490, 1
    %v492 = vadd.f32 %v490, %v491
    %s493 = vtos %v492
    %s494 = sld [smem:[#allocation7]]
    %s495 = sld [smem:[#allocation7 + $0x1]]
    %s496 = smul.f32 %s493, %s495
    %s497 = smul.f32 %s494, %s494
    %s498 = smax.f32 %s497, 1.0
    %v499 = vstv %s498
    %v500 = vrcp.pop %v499
    %v501 = vmul.f32 %v499, %v500
    %v502 = vsub.f32 1.0, %v501
    %v503 = vmul.f32 %v500, %v502
    %v504 = vadd.f32 %v500, %v503
    %vm505 = vweird.f32 %v499
    %vm506 = vweird.f32 %v500
    %vm507 = vmor %vm505, %vm506
    %v508 = vsel %vm507, %v500, %v504
    %v509 = vand.u32 2147483647, %v499
    %vm510 = vcmp.eq.f32.partialorder %v509, 8.507059e+37
    %v511 = vand.u32 %v499, 2147483648
    %v512 = vor.u32 1.1754944e-38, %v511
    %v513 = vsel %vm510, %v512, %v508
    %s514 = vtos %v513
    %s515 = smul.f32 %s496, %s514
    %s516 = smul.f32 %s515, 0.1
    %s517 = sadd.f32 %s422, %s516
    %s518 = scalar_lea.smem [#allocation9], 0
    %519 = sst [smem:[%s518]] %s517
    // Predicated region
    $region34: #{hypersar_forward.1} parent=1 // pred_check
      _
    $region35: #{hypersar_forward.1} parent=1 // pred_check_branch
      %521 = sbr.rel (0) target = $region37
    $region36: #{hypersar_forward.1} parent=1 // pred_region
      %523 = vsyncadd [#allocation5], 0
      %s525 = sshll.u32 %s6, 4
      %s526 = int_to_ptr.hbm [resolvable:$true] %s525
      %528 = dma.smem_to_hbm [#allocation9], 16, %s526, [#allocation5]
    $region37: #{hypersar_forward.1} parent=1 // pred_fallthru
      _
    // Predicated region
    $region38: #{hypersar_forward.1} parent=1 // pred_check
      _
    $region39: #{hypersar_forward.1} parent=1 // pred_check_branch
      %530 = sbr.rel (0) target = $region41
    $region40: #{hypersar_forward.1} parent=1 // pred_region
      %532 = dma.done [#allocation5], 16
    $region41: #{hypersar_forward.1} parent=1 // pred_fallthru
      _
    %533 = sfence
    %534 = vsyncpa [#allocation5], 1
    %535 = vsyncpa [#allocation6], 1
    %536 = vsyncpa [#allocation8], 1

</llo_original>
